<compile_context>
chip_gen: v7x
topology: tpu7x:2x2x1
jax: 0.10.0
libtpu: 0.0.40
codegen_flags: <defaults>
</compile_context>

<pallas_src>
import jax
import jax.numpy as jnp
from jax.experimental import pallas as pl
from jax.experimental.pallas import tpu as pltpu

IN_FEATURES = 2048
OUT_FEATURES = 3


def _round_up(n, m):
    return ((n + m - 1) // m) * m


def _min_sublanes(dtype):
    # Minimum second-to-last block dim for the dtype's native (sublane, 128)
    # tile: f32 -> 8, bf16 -> 16, int8/fp8 -> 32.
    return max(8, 32 // jnp.dtype(dtype).itemsize)


def _default_tm():
    """Pick the batch tile per TPU generation (no vmem_limit flag needed)."""
    try:
        kind = jax.devices()[0].device_kind.lower()
    except Exception:
        return 512
    if "v6" in kind or "v7" in kind or "7x" in kind:
        # 32 MiB default scoped VMEM: 16 MiB x double-buffer + lane-padded
        # weight/bias/out fits with headroom; amortizes per-step overhead.
        return 1024
    # v5e and older / unknown: stay under the 16 MiB scoped default.
    return 512


def _linear_kernel(x_ref, w_ref, b_ref, o_ref):
    # One MXU matmul per batch tile, f32 accumulation, bias broadcast over the
    # sublane (row) axis, cast back to the output dtype.
    acc = jnp.dot(x_ref[...], w_ref[...], preferred_element_type=jnp.float32)
    o_ref[...] = (acc + b_ref[...]).astype(o_ref.dtype)


def d3t_forward(x, w_t, b2d, *, tm=None):
    """Pallas implementation of D3TModel.forward.

    Args:
      x:   [B, 2048] input.
      w_t: [2048, 3] weight, already transposed from PyTorch's [3, 2048].
      b2d: [1, 3]    bias, reshaped for sublane broadcast.
      tm:  batch tile size (defaults per TPU generation).
    Returns:
      [B, 3] output, same dtype as x.
    """
    B, K = x.shape
    assert K == IN_FEATURES
    assert w_t.shape == (IN_FEATURES, OUT_FEATURES)
    assert b2d.shape == (1, OUT_FEATURES)

    if tm is None:
        tm = _default_tm()
    sub = _min_sublanes(x.dtype)
    # Clamp for small batches; keep tm a multiple of the dtype's sublane tile.
    tm = max(sub, min(_round_up(tm, sub), _round_up(B, sub)))

    # Ragged last block is handled by Pallas' masked output writeback -- no
    # input padding / extra HBM traffic.
    grid = (pl.cdiv(B, tm),)

    itemsize = jnp.dtype(x.dtype).itemsize
    cost = pl.CostEstimate(
        flops=2 * B * IN_FEATURES * OUT_FEATURES,
        transcendentals=0,
        bytes_accessed=(
            B * IN_FEATURES * itemsize            # x read (dominant)
            + IN_FEATURES * OUT_FEATURES * itemsize  # weight read (once)
            + OUT_FEATURES * itemsize                # bias read (once)
            + B * OUT_FEATURES * itemsize            # output write
        ),
    )

    out = pl.pallas_call(
        _linear_kernel,
        out_shape=jax.ShapeDtypeStruct((B, OUT_FEATURES), x.dtype),
        grid_spec=pltpu.PrefetchScalarGridSpec(
            num_scalar_prefetch=0,
            grid=grid,
            in_specs=[
                # x streams through VMEM, one batch tile per grid step.
                pl.BlockSpec((tm, IN_FEATURES), lambda i: (i, 0)),
                # Weight / bias: constant block index -> resident across steps.
                pl.BlockSpec((IN_FEATURES, OUT_FEATURES), lambda i: (0, 0)),
                pl.BlockSpec((1, OUT_FEATURES), lambda i: (0, 0)),
            ],
            out_specs=pl.BlockSpec((tm, OUT_FEATURES), lambda i: (i, 0)),
        ),
        compiler_params=pltpu.CompilerParams(
            # Batch axis is fully independent -> let v7x shard grid steps
            # across its two TensorCores; no-op on single-core v5e/v6e.
            dimension_semantics=("parallel",),
        ),
        cost_estimate=cost,
    )(x, w_t, b2d)

    return out


def from_torch_layout(weight, bias):
    """Convert PyTorch nn.Linear params ([3,2048], [3]) to kernel layout once."""
    return weight.T, bias.reshape(1, OUT_FEATURES)


def init_params(key):
    """Deterministic init mirroring nn.Linear default (uniform +/- 1/sqrt(fan_in)).

    Returns (w_t [2048,3], b2d [1,3], weight [3,2048], bias [3]).
    """
    k_w, k_b = jax.random.split(key)
    bound = 1.0 / jnp.sqrt(float(IN_FEATURES))
    weight = jax.random.uniform(
        k_w, (OUT_FEATURES, IN_FEATURES), jnp.float32, minval=-bound, maxval=bound
    )
    bias = jax.random.uniform(
        k_b, (OUT_FEATURES,), jnp.float32, minval=-bound, maxval=bound
    )
    return from_torch_layout(weight, bias) + (weight, bias)


if __name__ == "__main__":
    key = jax.random.PRNGKey(0)
    k_x, k_p = jax.random.split(key)

    w_t, b2d, weight, bias = init_params(k_p)

    # Small demo batch.
    B = 8
    x = jax.random.normal(k_x, (B, IN_FEATURES), jnp.float32)
    out = jax.block_until_ready(d3t_forward(x, w_t, b2d))
    ref = x @ weight.T + bias
    assert out.shape == (B, OUT_FEATURES)
    assert jnp.allclose(out, ref, atol=1e-4, rtol=1e-4)

    # Ragged multi-step grid (B not a multiple of tm): exercises the masked
    # writeback of the final partial block now that the input jnp.pad is gone.
    B2 = 1030
    x2 = jax.random.normal(jax.random.PRNGKey(1), (B2, IN_FEATURES), jnp.float32)
    out2 = jax.block_until_ready(d3t_forward(x2, w_t, b2d, tm=512))
    ref2 = x2 @ weight.T + bias
    assert out2.shape == (B2, OUT_FEATURES)
    assert jnp.allclose(out2, ref2, atol=1e-4, rtol=1e-4)

    print("KERNEL_OK")
</pallas_src>

<mosaic_0001>
module attributes {stable_mosaic.version = 11 : i64} {
  func.func @_linear_kernel(%arg0: i32, %arg1: memref<8x2048xf32, #tpu.memory_space<vmem>>, %arg2: memref<2048x3xf32, #tpu.memory_space<vmem>>, %arg3: memref<1x3xf32, #tpu.memory_space<vmem>>, %arg4: memref<8x3xf32, #tpu.memory_space<vmem>>) attributes {dimension_semantics = [#tpu.dimension_semantics<parallel>], iteration_bounds = array<i64: 1>, scalar_prefetch = 0 : i64, scratch_operands = 0 : i64, tpu.core_type = #tpu.core_type<tc>, window_params = [{transform_indices = @transform_0, window_bounds = array<i64: 8, 2048>}, {pipeline_mode = #tpu.pipeline_mode<synchronous>, transform_indices = @transform_1, window_bounds = array<i64: 2048, 3>}, {pipeline_mode = #tpu.pipeline_mode<synchronous>, transform_indices = @transform_2, window_bounds = array<i64: 1, 3>}, {transform_indices = @transform_3, window_bounds = array<i64: 8, 3>}]} {
    %c0 = arith.constant 0 : index
    %c0_0 = arith.constant 0 : index
    %0 = vector.load %arg1[%c0, %c0_0] : memref<8x2048xf32, #tpu.memory_space<vmem>>, vector<8x2048xf32>
    %c0_1 = arith.constant 0 : index
    %c0_2 = arith.constant 0 : index
    %1 = vector.load %arg2[%c0_1, %c0_2] : memref<2048x3xf32, #tpu.memory_space<vmem>>, vector<2048x3xf32>
    %cst = arith.constant dense<0.000000e+00> : vector<8x3xf32>
    %2 = tpu.matmul %0, %1, %cst {dimension_numbers = #tpu.dot_dimension_numbers<[1], [0], [0], [1], [0, 0, 1, 1], [], []>} : vector<8x2048xf32>, vector<2048x3xf32>, vector<8x3xf32> -> vector<8x3xf32>
    %c0_3 = arith.constant 0 : index
    %c0_4 = arith.constant 0 : index
    %3 = vector.load %arg3[%c0_3, %c0_4] : memref<1x3xf32, #tpu.memory_space<vmem>>, vector<1x3xf32>
    %4 = vector.broadcast %3 : vector<1x3xf32> to vector<8x3xf32>
    %5 = arith.addf %2, %4 : vector<8x3xf32>
    %c0_5 = arith.constant 0 : index
    %c0_6 = arith.constant 0 : index
    %6 = vector.load %arg4[%c0_5, %c0_6] : memref<8x3xf32, #tpu.memory_space<vmem>>, vector<8x3xf32>
    tpu.vector_store %arg4[%c0_5, %c0_6], %5 {strides = array<i32>} : memref<8x3xf32, #tpu.memory_space<vmem>>, vector<8x3xf32>,
    return
  }
  func.func @transform_0(%arg0: i32) -> (i32, i32) {
    %c0_i32 = arith.constant 0 : i32
    %c0_i32_0 = arith.constant 0 : i32
    return %arg0, %c0_i32 : i32, i32
  }
  func.func @transform_1(%arg0: i32) -> (i32, i32) {
    %c0_i32 = arith.constant 0 : i32
    %c0_i32_0 = arith.constant 0 : i32
    %c0_i32_1 = arith.constant 0 : i32
    return %c0_i32, %c0_i32_0 : i32, i32
  }
  func.func @transform_2(%arg0: i32) -> (i32, i32) {
    %c0_i32 = arith.constant 0 : i32
    %c0_i32_0 = arith.constant 0 : i32
    %c0_i32_1 = arith.constant 0 : i32
    return %c0_i32, %c0_i32_0 : i32, i32
  }
  func.func @transform_3(%arg0: i32) -> (i32, i32) {
    %c0_i32 = arith.constant 0 : i32
    %c0_i32_0 = arith.constant 0 : i32
    return %arg0, %c0_i32 : i32, i32
  }
}

</mosaic_0001>

<llo_original>
// kernel: tpu_custom_call.1
$region0: #{tpu_custom_call.1}
  #allocation0 [shape = 'u32[]', space=smem, size = 0x4, offset = 0x4, fixed_abs, tag = 'smem constant byte address 0x4 - core index']
  #allocation1 [shape = 'u32[144,128]{1,0:T(1,128)}', space=vmem, size = 0x12000, scoped, tag = 'internal scratch']
  %s0 = inlined_call_operand.vmem [shape: f32[8,2048], index: 0, kind: input, shape index: {}]
  %s1 = inlined_call_operand.vmem [shape: f32[2048,3], index: 1, kind: input, shape index: {}]
  %s2 = inlined_call_operand.vmem [shape: f32[1,3], index: 2, kind: input, shape index: {}]
  %s3 = inlined_call_operand.vmem [shape: f32[8,3], index: 3, kind: output, shape index: {}]
  %s4 = sld [smem:[#allocation0]]
  $region22: #{tpu_custom_call.1} parent=0
    _
  %s6 = ssub.s32 1, %s4
  %s7 = scalar_select 0, %s6, %s4
  // Predicated region
  $region2: #{tpu_custom_call.1} parent=0 // pred_check
    _
  $region3: #{tpu_custom_call.1} parent=0 // pred_check_branch
    %9 = sbr.rel (0) target = $region5
  $region4: #{tpu_custom_call.1} parent=0 // pred_region
    _
  $region5: #{tpu_custom_call.1} parent=0 // pred_fallthru
    _
  // Predicated region
  $region6: #{tpu_custom_call.1} parent=0 // pred_check
    _
  $region7: #{tpu_custom_call.1} parent=0 // pred_check_branch
    %11 = sbr.rel (0) target = $region9
  $region8: #{tpu_custom_call.1} parent=0 // pred_region
    _
  $region9: #{tpu_custom_call.1} parent=0 // pred_fallthru
    _
  // Predicated region
  $region10: #{tpu_custom_call.1} parent=0 // pred_check
    _
  $region11: #{tpu_custom_call.1} parent=0 // pred_check_branch
    %13 = sbr.rel (0) target = $region13
  $region12: #{tpu_custom_call.1} parent=0 // pred_region
    _
  $region13: #{tpu_custom_call.1} parent=0 // pred_fallthru
    _
  %v14 = vld [vmem:[%s0] sm:$0xff]
  %v15 = vld [vmem:[%s0 + $0x8] sm:$0xff]
  %v16 = vld [vmem:[%s0 + $0x10] sm:$0xff]
  %v17 = vld [vmem:[%s0 + $0x18] sm:$0xff]
  %v18 = vld [vmem:[%s0 + $0x20] sm:$0xff]
  %v19 = vld [vmem:[%s0 + $0x28] sm:$0xff]
  %v20 = vld [vmem:[%s0 + $0x30] sm:$0xff]
  %v21 = vld [vmem:[%s0 + $0x38] sm:$0xff]
  %v22 = vld [vmem:[%s0 + $0x40] sm:$0xff]
  %v23 = vld [vmem:[%s0 + $0x48] sm:$0xff]
  %v24 = vld [vmem:[%s0 + $0x50] sm:$0xff]
  %v25 = vld [vmem:[%s0 + $0x58] sm:$0xff]
  %v26 = vld [vmem:[%s0 + $0x60] sm:$0xff]
  %v27 = vld [vmem:[%s0 + $0x68] sm:$0xff]
  %v28 = vld [vmem:[%s0 + $0x70] sm:$0xff]
  %v29 = vld [vmem:[%s0 + $0x78] sm:$0xff]
  %v30 = vld [vmem:[%s1] sm:$0xff]
  %v31 = vld [vmem:[%s1 + $0x8] sm:$0xff]
  %v32 = vld [vmem:[%s1 + $0x10] sm:$0xff]
  %v33 = vld [vmem:[%s1 + $0x18] sm:$0xff]
  %v34 = vld [vmem:[%s1 + $0x20] sm:$0xff]
  %v35 = vld [vmem:[%s1 + $0x28] sm:$0xff]
  %v36 = vld [vmem:[%s1 + $0x30] sm:$0xff]
  %v37 = vld [vmem:[%s1 + $0x38] sm:$0xff]
  %v38 = vld [vmem:[%s1 + $0x40] sm:$0xff]
  %v39 = vld [vmem:[%s1 + $0x48] sm:$0xff]
  %v40 = vld [vmem:[%s1 + $0x50] sm:$0xff]
  %v41 = vld [vmem:[%s1 + $0x58] sm:$0xff]
  %v42 = vld [vmem:[%s1 + $0x60] sm:$0xff]
  %v43 = vld [vmem:[%s1 + $0x68] sm:$0xff]
  %v44 = vld [vmem:[%s1 + $0x70] sm:$0xff]
  %v45 = vld [vmem:[%s1 + $0x78] sm:$0xff]
  %v46 = vld [vmem:[%s1 + $0x80] sm:$0xff]
  %v47 = vld [vmem:[%s1 + $0x88] sm:$0xff]
  %v48 = vld [vmem:[%s1 + $0x90] sm:$0xff]
  %v49 = vld [vmem:[%s1 + $0x98] sm:$0xff]
  %v50 = vld [vmem:[%s1 + $0xa0] sm:$0xff]
  %v51 = vld [vmem:[%s1 + $0xa8] sm:$0xff]
  %v52 = vld [vmem:[%s1 + $0xb0] sm:$0xff]
  %v53 = vld [vmem:[%s1 + $0xb8] sm:$0xff]
  %v54 = vld [vmem:[%s1 + $0xc0] sm:$0xff]
  %v55 = vld [vmem:[%s1 + $0xc8] sm:$0xff]
  %v56 = vld [vmem:[%s1 + $0xd0] sm:$0xff]
  %v57 = vld [vmem:[%s1 + $0xd8] sm:$0xff]
  %v58 = vld [vmem:[%s1 + $0xe0] sm:$0xff]
  %v59 = vld [vmem:[%s1 + $0xe8] sm:$0xff]
  %v60 = vld [vmem:[%s1 + $0xf0] sm:$0xff]
  %v61 = vld [vmem:[%s1 + $0xf8] sm:$0xff]
  %v62 = vld [vmem:[%s1 + $0x100] sm:$0xff]
  %v63 = vld [vmem:[%s1 + $0x108] sm:$0xff]
  %v64 = vld [vmem:[%s1 + $0x110] sm:$0xff]
  %v65 = vld [vmem:[%s1 + $0x118] sm:$0xff]
  %v66 = vld [vmem:[%s1 + $0x120] sm:$0xff]
  %v67 = vld [vmem:[%s1 + $0x128] sm:$0xff]
  %v68 = vld [vmem:[%s1 + $0x130] sm:$0xff]
  %v69 = vld [vmem:[%s1 + $0x138] sm:$0xff]
  %v70 = vld [vmem:[%s1 + $0x140] sm:$0xff]
  %v71 = vld [vmem:[%s1 + $0x148] sm:$0xff]
  %v72 = vld [vmem:[%s1 + $0x150] sm:$0xff]
  %v73 = vld [vmem:[%s1 + $0x158] sm:$0xff]
  %v74 = vld [vmem:[%s1 + $0x160] sm:$0xff]
  %v75 = vld [vmem:[%s1 + $0x168] sm:$0xff]
  %v76 = vld [vmem:[%s1 + $0x170] sm:$0xff]
  %v77 = vld [vmem:[%s1 + $0x178] sm:$0xff]
  %v78 = vld [vmem:[%s1 + $0x180] sm:$0xff]
  %v79 = vld [vmem:[%s1 + $0x188] sm:$0xff]
  %v80 = vld [vmem:[%s1 + $0x190] sm:$0xff]
  %v81 = vld [vmem:[%s1 + $0x198] sm:$0xff]
  %v82 = vld [vmem:[%s1 + $0x1a0] sm:$0xff]
  %v83 = vld [vmem:[%s1 + $0x1a8] sm:$0xff]
  %v84 = vld [vmem:[%s1 + $0x1b0] sm:$0xff]
  %v85 = vld [vmem:[%s1 + $0x1b8] sm:$0xff]
  %v86 = vld [vmem:[%s1 + $0x1c0] sm:$0xff]
  %v87 = vld [vmem:[%s1 + $0x1c8] sm:$0xff]
  %v88 = vld [vmem:[%s1 + $0x1d0] sm:$0xff]
  %v89 = vld [vmem:[%s1 + $0x1d8] sm:$0xff]
  %v90 = vld [vmem:[%s1 + $0x1e0] sm:$0xff]
  %v91 = vld [vmem:[%s1 + $0x1e8] sm:$0xff]
  %v92 = vld [vmem:[%s1 + $0x1f0] sm:$0xff]
  %v93 = vld [vmem:[%s1 + $0x1f8] sm:$0xff]
  %v94 = vld [vmem:[%s1 + $0x200] sm:$0xff]
  %v95 = vld [vmem:[%s1 + $0x208] sm:$0xff]
  %v96 = vld [vmem:[%s1 + $0x210] sm:$0xff]
  %v97 = vld [vmem:[%s1 + $0x218] sm:$0xff]
  %v98 = vld [vmem:[%s1 + $0x220] sm:$0xff]
  %v99 = vld [vmem:[%s1 + $0x228] sm:$0xff]
  %v100 = vld [vmem:[%s1 + $0x230] sm:$0xff]
  %v101 = vld [vmem:[%s1 + $0x238] sm:$0xff]
  %v102 = vld [vmem:[%s1 + $0x240] sm:$0xff]
  %v103 = vld [vmem:[%s1 + $0x248] sm:$0xff]
  %v104 = vld [vmem:[%s1 + $0x250] sm:$0xff]
  %v105 = vld [vmem:[%s1 + $0x258] sm:$0xff]
  %v106 = vld [vmem:[%s1 + $0x260] sm:$0xff]
  %v107 = vld [vmem:[%s1 + $0x268] sm:$0xff]
  %v108 = vld [vmem:[%s1 + $0x270] sm:$0xff]
  %v109 = vld [vmem:[%s1 + $0x278] sm:$0xff]
  %v110 = vld [vmem:[%s1 + $0x280] sm:$0xff]
  %v111 = vld [vmem:[%s1 + $0x288] sm:$0xff]
  %v112 = vld [vmem:[%s1 + $0x290] sm:$0xff]
  %v113 = vld [vmem:[%s1 + $0x298] sm:$0xff]
  %v114 = vld [vmem:[%s1 + $0x2a0] sm:$0xff]
  %v115 = vld [vmem:[%s1 + $0x2a8] sm:$0xff]
  %v116 = vld [vmem:[%s1 + $0x2b0] sm:$0xff]
  %v117 = vld [vmem:[%s1 + $0x2b8] sm:$0xff]
  %v118 = vld [vmem:[%s1 + $0x2c0] sm:$0xff]
  %v119 = vld [vmem:[%s1 + $0x2c8] sm:$0xff]
  %v120 = vld [vmem:[%s1 + $0x2d0] sm:$0xff]
  %v121 = vld [vmem:[%s1 + $0x2d8] sm:$0xff]
  %v122 = vld [vmem:[%s1 + $0x2e0] sm:$0xff]
  %v123 = vld [vmem:[%s1 + $0x2e8] sm:$0xff]
  %v124 = vld [vmem:[%s1 + $0x2f0] sm:$0xff]
  %v125 = vld [vmem:[%s1 + $0x2f8] sm:$0xff]
  %v126 = vld [vmem:[%s1 + $0x300] sm:$0xff]
  %v127 = vld [vmem:[%s1 + $0x308] sm:$0xff]
  %v128 = vld [vmem:[%s1 + $0x310] sm:$0xff]
  %v129 = vld [vmem:[%s1 + $0x318] sm:$0xff]
  %v130 = vld [vmem:[%s1 + $0x320] sm:$0xff]
  %v131 = vld [vmem:[%s1 + $0x328] sm:$0xff]
  %v132 = vld [vmem:[%s1 + $0x330] sm:$0xff]
  %v133 = vld [vmem:[%s1 + $0x338] sm:$0xff]
  %v134 = vld [vmem:[%s1 + $0x340] sm:$0xff]
  %v135 = vld [vmem:[%s1 + $0x348] sm:$0xff]
  %v136 = vld [vmem:[%s1 + $0x350] sm:$0xff]
  %v137 = vld [vmem:[%s1 + $0x358] sm:$0xff]
  %v138 = vld [vmem:[%s1 + $0x360] sm:$0xff]
  %v139 = vld [vmem:[%s1 + $0x368] sm:$0xff]
  %v140 = vld [vmem:[%s1 + $0x370] sm:$0xff]
  %v141 = vld [vmem:[%s1 + $0x378] sm:$0xff]
  %v142 = vld [vmem:[%s1 + $0x380] sm:$0xff]
  %v143 = vld [vmem:[%s1 + $0x388] sm:$0xff]
  %v144 = vld [vmem:[%s1 + $0x390] sm:$0xff]
  %v145 = vld [vmem:[%s1 + $0x398] sm:$0xff]
  %v146 = vld [vmem:[%s1 + $0x3a0] sm:$0xff]
  %v147 = vld [vmem:[%s1 + $0x3a8] sm:$0xff]
  %v148 = vld [vmem:[%s1 + $0x3b0] sm:$0xff]
  %v149 = vld [vmem:[%s1 + $0x3b8] sm:$0xff]
  %v150 = vld [vmem:[%s1 + $0x3c0] sm:$0xff]
  %v151 = vld [vmem:[%s1 + $0x3c8] sm:$0xff]
  %v152 = vld [vmem:[%s1 + $0x3d0] sm:$0xff]
  %v153 = vld [vmem:[%s1 + $0x3d8] sm:$0xff]
  %v154 = vld [vmem:[%s1 + $0x3e0] sm:$0xff]
  %v155 = vld [vmem:[%s1 + $0x3e8] sm:$0xff]
  %v156 = vld [vmem:[%s1 + $0x3f0] sm:$0xff]
  %v157 = vld [vmem:[%s1 + $0x3f8] sm:$0xff]
  %v158 = vld [vmem:[%s1 + $0x400] sm:$0xff]
  %v159 = vld [vmem:[%s1 + $0x408] sm:$0xff]
  %v160 = vld [vmem:[%s1 + $0x410] sm:$0xff]
  %v161 = vld [vmem:[%s1 + $0x418] sm:$0xff]
  %v162 = vld [vmem:[%s1 + $0x420] sm:$0xff]
  %v163 = vld [vmem:[%s1 + $0x428] sm:$0xff]
  %v164 = vld [vmem:[%s1 + $0x430] sm:$0xff]
  %v165 = vld [vmem:[%s1 + $0x438] sm:$0xff]
  %v166 = vld [vmem:[%s1 + $0x440] sm:$0xff]
  %v167 = vld [vmem:[%s1 + $0x448] sm:$0xff]
  %v168 = vld [vmem:[%s1 + $0x450] sm:$0xff]
  %v169 = vld [vmem:[%s1 + $0x458] sm:$0xff]
  %v170 = vld [vmem:[%s1 + $0x460] sm:$0xff]
  %v171 = vld [vmem:[%s1 + $0x468] sm:$0xff]
  %v172 = vld [vmem:[%s1 + $0x470] sm:$0xff]
  %v173 = vld [vmem:[%s1 + $0x478] sm:$0xff]
  %v174 = vld [vmem:[%s1 + $0x480] sm:$0xff]
  %v175 = vld [vmem:[%s1 + $0x488] sm:$0xff]
  %v176 = vld [vmem:[%s1 + $0x490] sm:$0xff]
  %v177 = vld [vmem:[%s1 + $0x498] sm:$0xff]
  %v178 = vld [vmem:[%s1 + $0x4a0] sm:$0xff]
  %v179 = vld [vmem:[%s1 + $0x4a8] sm:$0xff]
  %v180 = vld [vmem:[%s1 + $0x4b0] sm:$0xff]
  %v181 = vld [vmem:[%s1 + $0x4b8] sm:$0xff]
  %v182 = vld [vmem:[%s1 + $0x4c0] sm:$0xff]
  %v183 = vld [vmem:[%s1 + $0x4c8] sm:$0xff]
  %v184 = vld [vmem:[%s1 + $0x4d0] sm:$0xff]
  %v185 = vld [vmem:[%s1 + $0x4d8] sm:$0xff]
  %v186 = vld [vmem:[%s1 + $0x4e0] sm:$0xff]
  %v187 = vld [vmem:[%s1 + $0x4e8] sm:$0xff]
  %v188 = vld [vmem:[%s1 + $0x4f0] sm:$0xff]
  %v189 = vld [vmem:[%s1 + $0x4f8] sm:$0xff]
  %v190 = vld [vmem:[%s1 + $0x500] sm:$0xff]
  %v191 = vld [vmem:[%s1 + $0x508] sm:$0xff]
  %v192 = vld [vmem:[%s1 + $0x510] sm:$0xff]
  %v193 = vld [vmem:[%s1 + $0x518] sm:$0xff]
  %v194 = vld [vmem:[%s1 + $0x520] sm:$0xff]
  %v195 = vld [vmem:[%s1 + $0x528] sm:$0xff]
  %v196 = vld [vmem:[%s1 + $0x530] sm:$0xff]
  %v197 = vld [vmem:[%s1 + $0x538] sm:$0xff]
  %v198 = vld [vmem:[%s1 + $0x540] sm:$0xff]
  %v199 = vld [vmem:[%s1 + $0x548] sm:$0xff]
  %v200 = vld [vmem:[%s1 + $0x550] sm:$0xff]
  %v201 = vld [vmem:[%s1 + $0x558] sm:$0xff]
  %v202 = vld [vmem:[%s1 + $0x560] sm:$0xff]
  %v203 = vld [vmem:[%s1 + $0x568] sm:$0xff]
  %v204 = vld [vmem:[%s1 + $0x570] sm:$0xff]
  %v205 = vld [vmem:[%s1 + $0x578] sm:$0xff]
  %v206 = vld [vmem:[%s1 + $0x580] sm:$0xff]
  %v207 = vld [vmem:[%s1 + $0x588] sm:$0xff]
  %v208 = vld [vmem:[%s1 + $0x590] sm:$0xff]
  %v209 = vld [vmem:[%s1 + $0x598] sm:$0xff]
  %v210 = vld [vmem:[%s1 + $0x5a0] sm:$0xff]
  %v211 = vld [vmem:[%s1 + $0x5a8] sm:$0xff]
  %v212 = vld [vmem:[%s1 + $0x5b0] sm:$0xff]
  %v213 = vld [vmem:[%s1 + $0x5b8] sm:$0xff]
  %v214 = vld [vmem:[%s1 + $0x5c0] sm:$0xff]
  %v215 = vld [vmem:[%s1 + $0x5c8] sm:$0xff]
  %v216 = vld [vmem:[%s1 + $0x5d0] sm:$0xff]
  %v217 = vld [vmem:[%s1 + $0x5d8] sm:$0xff]
  %v218 = vld [vmem:[%s1 + $0x5e0] sm:$0xff]
  %v219 = vld [vmem:[%s1 + $0x5e8] sm:$0xff]
  %v220 = vld [vmem:[%s1 + $0x5f0] sm:$0xff]
  %v221 = vld [vmem:[%s1 + $0x5f8] sm:$0xff]
  %v222 = vld [vmem:[%s1 + $0x600] sm:$0xff]
  %v223 = vld [vmem:[%s1 + $0x608] sm:$0xff]
  %v224 = vld [vmem:[%s1 + $0x610] sm:$0xff]
  %v225 = vld [vmem:[%s1 + $0x618] sm:$0xff]
  %v226 = vld [vmem:[%s1 + $0x620] sm:$0xff]
  %v227 = vld [vmem:[%s1 + $0x628] sm:$0xff]
  %v228 = vld [vmem:[%s1 + $0x630] sm:$0xff]
  %v229 = vld [vmem:[%s1 + $0x638] sm:$0xff]
  %v230 = vld [vmem:[%s1 + $0x640] sm:$0xff]
  %v231 = vld [vmem:[%s1 + $0x648] sm:$0xff]
  %v232 = vld [vmem:[%s1 + $0x650] sm:$0xff]
  %v233 = vld [vmem:[%s1 + $0x658] sm:$0xff]
  %v234 = vld [vmem:[%s1 + $0x660] sm:$0xff]
  %v235 = vld [vmem:[%s1 + $0x668] sm:$0xff]
  %v236 = vld [vmem:[%s1 + $0x670] sm:$0xff]
  %v237 = vld [vmem:[%s1 + $0x678] sm:$0xff]
  %v238 = vld [vmem:[%s1 + $0x680] sm:$0xff]
  %v239 = vld [vmem:[%s1 + $0x688] sm:$0xff]
  %v240 = vld [vmem:[%s1 + $0x690] sm:$0xff]
  %v241 = vld [vmem:[%s1 + $0x698] sm:$0xff]
  %v242 = vld [vmem:[%s1 + $0x6a0] sm:$0xff]
  %v243 = vld [vmem:[%s1 + $0x6a8] sm:$0xff]
  %v244 = vld [vmem:[%s1 + $0x6b0] sm:$0xff]
  %v245 = vld [vmem:[%s1 + $0x6b8] sm:$0xff]
  %v246 = vld [vmem:[%s1 + $0x6c0] sm:$0xff]
  %v247 = vld [vmem:[%s1 + $0x6c8] sm:$0xff]
  %v248 = vld [vmem:[%s1 + $0x6d0] sm:$0xff]
  %v249 = vld [vmem:[%s1 + $0x6d8] sm:$0xff]
  %v250 = vld [vmem:[%s1 + $0x6e0] sm:$0xff]
  %v251 = vld [vmem:[%s1 + $0x6e8] sm:$0xff]
  %v252 = vld [vmem:[%s1 + $0x6f0] sm:$0xff]
  %v253 = vld [vmem:[%s1 + $0x6f8] sm:$0xff]
  %v254 = vld [vmem:[%s1 + $0x700] sm:$0xff]
  %v255 = vld [vmem:[%s1 + $0x708] sm:$0xff]
  %v256 = vld [vmem:[%s1 + $0x710] sm:$0xff]
  %v257 = vld [vmem:[%s1 + $0x718] sm:$0xff]
  %v258 = vld [vmem:[%s1 + $0x720] sm:$0xff]
  %v259 = vld [vmem:[%s1 + $0x728] sm:$0xff]
  %v260 = vld [vmem:[%s1 + $0x730] sm:$0xff]
  %v261 = vld [vmem:[%s1 + $0x738] sm:$0xff]
  %v262 = vld [vmem:[%s1 + $0x740] sm:$0xff]
  %v263 = vld [vmem:[%s1 + $0x748] sm:$0xff]
  %v264 = vld [vmem:[%s1 + $0x750] sm:$0xff]
  %v265 = vld [vmem:[%s1 + $0x758] sm:$0xff]
  %v266 = vld [vmem:[%s1 + $0x760] sm:$0xff]
  %v267 = vld [vmem:[%s1 + $0x768] sm:$0xff]
  %v268 = vld [vmem:[%s1 + $0x770] sm:$0xff]
  %v269 = vld [vmem:[%s1 + $0x778] sm:$0xff]
  %v270 = vld [vmem:[%s1 + $0x780] sm:$0xff]
  %v271 = vld [vmem:[%s1 + $0x788] sm:$0xff]
  %v272 = vld [vmem:[%s1 + $0x790] sm:$0xff]
  %v273 = vld [vmem:[%s1 + $0x798] sm:$0xff]
  %v274 = vld [vmem:[%s1 + $0x7a0] sm:$0xff]
  %v275 = vld [vmem:[%s1 + $0x7a8] sm:$0xff]
  %v276 = vld [vmem:[%s1 + $0x7b0] sm:$0xff]
  %v277 = vld [vmem:[%s1 + $0x7b8] sm:$0xff]
  %v278 = vld [vmem:[%s1 + $0x7c0] sm:$0xff]
  %v279 = vld [vmem:[%s1 + $0x7c8] sm:$0xff]
  %v280 = vld [vmem:[%s1 + $0x7d0] sm:$0xff]
  %v281 = vld [vmem:[%s1 + $0x7d8] sm:$0xff]
  %v282 = vld [vmem:[%s1 + $0x7e0] sm:$0xff]
  %v283 = vld [vmem:[%s1 + $0x7e8] sm:$0xff]
  %v284 = vld [vmem:[%s1 + $0x7f0] sm:$0xff]
  %v285 = vld [vmem:[%s1 + $0x7f8] sm:$0xff]
  %v286 = vld [vmem:[%s2] sm:$0x1]
  %v288 = vlaneseq
  %v289 = vshrl.u32 %v288, 7
  %v290 = vsub.s32 0, %v289
  %v291 = vrot.slane %v286, %v290
  %293 = vmatprep.subr.mxu0 0.0
  %294 = vmatpush1.msra.mxu0 %v30
  %295 = vmatprep.subr.mxu0 0.0
  %296 = vmatpush1.msra.mxu0 %v31
  %297 = vmatprep.subr.mxu0 0.0
  %298 = vmatpush1.msra.mxu0 %v32
  %299 = vmatprep.subr.mxu0 0.0
  %300 = vmatpush1.msra.mxu0 %v33
  %301 = vmatprep.subr.mxu0 0.0
  %302 = vmatpush1.msra.mxu0 %v34
  %303 = vmatprep.subr.mxu0 0.0
  %304 = vmatpush1.msra.mxu0 %v35
  %305 = vmatprep.subr.mxu0 0.0
  %306 = vmatpush1.msra.mxu0 %v36
  %307 = vmatprep.subr.mxu0 0.0
  %308 = vmatpush1.msra.mxu0 %v37
  %309 = vmatprep.subr.mxu0 0.0
  %310 = vmatpush1.msra.mxu0 %v38
  %311 = vmatprep.subr.mxu0 0.0
  %312 = vmatpush1.msra.mxu0 %v39
  %313 = vmatprep.subr.mxu0 0.0
  %314 = vmatpush1.msra.mxu0 %v40
  %315 = vmatprep.subr.mxu0 0.0
  %316 = vmatpush1.msra.mxu0 %v41
  %317 = vmatprep.subr.mxu0 0.0
  %318 = vmatpush1.msra.mxu0 %v42
  %319 = vmatprep.subr.mxu0 0.0
  %320 = vmatpush1.msra.mxu0 %v43
  %321 = vmatprep.subr.mxu0 0.0
  %322 = vmatpush1.msra.mxu0 %v44
  %323 = vmatprep.subr.mxu0 0.0
  %324 = vmatpush1.msra.mxu0 %v45
  %325 = vmatprep.subr.mxu0 0.0
  %326 = vmatpush1.msra.mxu0 %v46
  %327 = vmatprep.subr.mxu0 0.0
  %328 = vmatpush1.msra.mxu0 %v47
  %329 = vmatprep.subr.mxu0 0.0
  %330 = vmatpush1.msra.mxu0 %v48
  %331 = vmatprep.subr.mxu0 0.0
  %332 = vmatpush1.msra.mxu0 %v49
  %333 = vmatprep.subr.mxu0 0.0
  %334 = vmatpush1.msra.mxu0 %v50
  %335 = vmatprep.subr.mxu0 0.0
  %336 = vmatpush1.msra.mxu0 %v51
  %337 = vmatprep.subr.mxu0 0.0
  %338 = vmatpush1.msra.mxu0 %v52
  %339 = vmatprep.subr.mxu0 0.0
  %340 = vmatpush1.msra.mxu0 %v53
  %341 = vmatprep.subr.mxu0 0.0
  %342 = vmatpush1.msra.mxu0 %v54
  %343 = vmatprep.subr.mxu0 0.0
  %344 = vmatpush1.msra.mxu0 %v55
  %345 = vmatprep.subr.mxu0 0.0
  %346 = vmatpush1.msra.mxu0 %v56
  %347 = vmatprep.subr.mxu0 0.0
  %348 = vmatpush1.msra.mxu0 %v57
  %349 = vmatprep.subr.mxu0 0.0
  %350 = vmatpush1.msra.mxu0 %v58
  %351 = vmatprep.subr.mxu0 0.0
  %352 = vmatpush1.msra.mxu0 %v59
  %353 = vmatprep.subr.mxu0 0.0
  %354 = vmatpush1.msra.mxu0 %v60
  %355 = vmatprep.subr.mxu0 0.0
  %356 = vmatpush1.msra.mxu0 %v61
  %357 = vmatprep.mubr.f32.mxu0 %v15
  %358 = vmatmul.mubr.f32.gmra.mrb[0].mxu0 %v14
  %v359 = vpop.f32.mrb[0].mxu0
  %v360 = vadd.f32 %v291, %v359
  %v361 = vpop.f32.mrb[0].mxu0
  %362 = vdwg.mxu0
  %363 = vmatprep.subr.mxu0 0.0
  %364 = vmatpush1.msra.mxu0 %v62
  %365 = vmatprep.subr.mxu0 0.0
  %366 = vmatpush1.msra.mxu0 %v63
  %367 = vmatprep.subr.mxu0 0.0
  %368 = vmatpush1.msra.mxu0 %v64
  %369 = vmatprep.subr.mxu0 0.0
  %370 = vmatpush1.msra.mxu0 %v65
  %371 = vmatprep.subr.mxu0 0.0
  %372 = vmatpush1.msra.mxu0 %v66
  %373 = vmatprep.subr.mxu0 0.0
  %374 = vmatpush1.msra.mxu0 %v67
  %375 = vmatprep.subr.mxu0 0.0
  %376 = vmatpush1.msra.mxu0 %v68
  %377 = vmatprep.subr.mxu0 0.0
  %378 = vmatpush1.msra.mxu0 %v69
  %379 = vmatprep.subr.mxu0 0.0
  %380 = vmatpush1.msra.mxu0 %v70
  %381 = vmatprep.subr.mxu0 0.0
  %382 = vmatpush1.msra.mxu0 %v71
  %383 = vmatprep.subr.mxu0 0.0
  %384 = vmatpush1.msra.mxu0 %v72
  %385 = vmatprep.subr.mxu0 0.0
  %386 = vmatpush1.msra.mxu0 %v73
  %387 = vmatprep.subr.mxu0 0.0
  %388 = vmatpush1.msra.mxu0 %v74
  %389 = vmatprep.subr.mxu0 0.0
  %390 = vmatpush1.msra.mxu0 %v75
  %391 = vmatprep.subr.mxu0 0.0
  %392 = vmatpush1.msra.mxu0 %v76
  %393 = vmatprep.subr.mxu0 0.0
  %394 = vmatpush1.msra.mxu0 %v77
  %395 = vmatprep.subr.mxu0 0.0
  %396 = vmatpush1.msra.mxu0 %v78
  %397 = vmatprep.subr.mxu0 0.0
  %398 = vmatpush1.msra.mxu0 %v79
  %399 = vmatprep.subr.mxu0 0.0
  %400 = vmatpush1.msra.mxu0 %v80
  %401 = vmatprep.subr.mxu0 0.0
  %402 = vmatpush1.msra.mxu0 %v81
  %403 = vmatprep.subr.mxu0 0.0
  %404 = vmatpush1.msra.mxu0 %v82
  %405 = vmatprep.subr.mxu0 0.0
  %406 = vmatpush1.msra.mxu0 %v83
  %407 = vmatprep.subr.mxu0 0.0
  %408 = vmatpush1.msra.mxu0 %v84
  %409 = vmatprep.subr.mxu0 0.0
  %410 = vmatpush1.msra.mxu0 %v85
  %411 = vmatprep.subr.mxu0 0.0
  %412 = vmatpush1.msra.mxu0 %v86
  %413 = vmatprep.subr.mxu0 0.0
  %414 = vmatpush1.msra.mxu0 %v87
  %415 = vmatprep.subr.mxu0 0.0
  %416 = vmatpush1.msra.mxu0 %v88
  %417 = vmatprep.subr.mxu0 0.0
  %418 = vmatpush1.msra.mxu0 %v89
  %419 = vmatprep.subr.mxu0 0.0
  %420 = vmatpush1.msra.mxu0 %v90
  %421 = vmatprep.subr.mxu0 0.0
  %422 = vmatpush1.msra.mxu0 %v91
  %423 = vmatprep.subr.mxu0 0.0
  %424 = vmatpush1.msra.mxu0 %v92
  %425 = vmatprep.subr.mxu0 0.0
  %426 = vmatpush1.msra.mxu0 %v93
  %427 = vmatprep.mubr.f32.mxu0 %v17
  %428 = vmatmul.mubr.f32.gmra.mrb[0].mxu0 %v16
  %v429 = vpop.f32.mrb[0].mxu0
  %v430 = vadd.f32 %v360, %v429
  %v431 = vpop.f32.mrb[0].mxu0
  %432 = vdwg.mxu0
  %433 = vmatprep.subr.mxu0 0.0
  %434 = vmatpush1.msra.mxu0 %v94
  %435 = vmatprep.subr.mxu0 0.0
  %436 = vmatpush1.msra.mxu0 %v95
  %437 = vmatprep.subr.mxu0 0.0
  %438 = vmatpush1.msra.mxu0 %v96
  %439 = vmatprep.subr.mxu0 0.0
  %440 = vmatpush1.msra.mxu0 %v97
  %441 = vmatprep.subr.mxu0 0.0
  %442 = vmatpush1.msra.mxu0 %v98
  %443 = vmatprep.subr.mxu0 0.0
  %444 = vmatpush1.msra.mxu0 %v99
  %445 = vmatprep.subr.mxu0 0.0
  %446 = vmatpush1.msra.mxu0 %v100
  %447 = vmatprep.subr.mxu0 0.0
  %448 = vmatpush1.msra.mxu0 %v101
  %449 = vmatprep.subr.mxu0 0.0
  %450 = vmatpush1.msra.mxu0 %v102
  %451 = vmatprep.subr.mxu0 0.0
  %452 = vmatpush1.msra.mxu0 %v103
  %453 = vmatprep.subr.mxu0 0.0
  %454 = vmatpush1.msra.mxu0 %v104
  %455 = vmatprep.subr.mxu0 0.0
  %456 = vmatpush1.msra.mxu0 %v105
  %457 = vmatprep.subr.mxu0 0.0
  %458 = vmatpush1.msra.mxu0 %v106
  %459 = vmatprep.subr.mxu0 0.0
  %460 = vmatpush1.msra.mxu0 %v107
  %461 = vmatprep.subr.mxu0 0.0
  %462 = vmatpush1.msra.mxu0 %v108
  %463 = vmatprep.subr.mxu0 0.0
  %464 = vmatpush1.msra.mxu0 %v109
  %465 = vmatprep.subr.mxu0 0.0
  %466 = vmatpush1.msra.mxu0 %v110
  %467 = vmatprep.subr.mxu0 0.0
  %468 = vmatpush1.msra.mxu0 %v111
  %469 = vmatprep.subr.mxu0 0.0
  %470 = vmatpush1.msra.mxu0 %v112
  %471 = vmatprep.subr.mxu0 0.0
  %472 = vmatpush1.msra.mxu0 %v113
  %473 = vmatprep.subr.mxu0 0.0
  %474 = vmatpush1.msra.mxu0 %v114
  %475 = vmatprep.subr.mxu0 0.0
  %476 = vmatpush1.msra.mxu0 %v115
  %477 = vmatprep.subr.mxu0 0.0
  %478 = vmatpush1.msra.mxu0 %v116
  %479 = vmatprep.subr.mxu0 0.0
  %480 = vmatpush1.msra.mxu0 %v117
  %481 = vmatprep.subr.mxu0 0.0
  %482 = vmatpush1.msra.mxu0 %v118
  %483 = vmatprep.subr.mxu0 0.0
  %484 = vmatpush1.msra.mxu0 %v119
  %485 = vmatprep.subr.mxu0 0.0
  %486 = vmatpush1.msra.mxu0 %v120
  %487 = vmatprep.subr.mxu0 0.0
  %488 = vmatpush1.msra.mxu0 %v121
  %489 = vmatprep.subr.mxu0 0.0
  %490 = vmatpush1.msra.mxu0 %v122
  %491 = vmatprep.subr.mxu0 0.0
  %492 = vmatpush1.msra.mxu0 %v123
  %493 = vmatprep.subr.mxu0 0.0
  %494 = vmatpush1.msra.mxu0 %v124
  %495 = vmatprep.subr.mxu0 0.0
  %496 = vmatpush1.msra.mxu0 %v125
  %497 = vmatprep.mubr.f32.mxu0 %v19
  %498 = vmatmul.mubr.f32.gmra.mrb[0].mxu0 %v18
  %v499 = vpop.f32.mrb[0].mxu0
  %v500 = vadd.f32 %v430, %v499
  %v501 = vpop.f32.mrb[0].mxu0
  %502 = vdwg.mxu0
  %503 = vmatprep.subr.mxu0 0.0
  %504 = vmatpush1.msra.mxu0 %v126
  %505 = vmatprep.subr.mxu0 0.0
  %506 = vmatpush1.msra.mxu0 %v127
  %507 = vmatprep.subr.mxu0 0.0
  %508 = vmatpush1.msra.mxu0 %v128
  %509 = vmatprep.subr.mxu0 0.0
  %510 = vmatpush1.msra.mxu0 %v129
  %511 = vmatprep.subr.mxu0 0.0
  %512 = vmatpush1.msra.mxu0 %v130
  %513 = vmatprep.subr.mxu0 0.0
  %514 = vmatpush1.msra.mxu0 %v131
  %515 = vmatprep.subr.mxu0 0.0
  %516 = vmatpush1.msra.mxu0 %v132
  %517 = vmatprep.subr.mxu0 0.0
  %518 = vmatpush1.msra.mxu0 %v133
  %519 = vmatprep.subr.mxu0 0.0
  %520 = vmatpush1.msra.mxu0 %v134
  %521 = vmatprep.subr.mxu0 0.0
  %522 = vmatpush1.msra.mxu0 %v135
  %523 = vmatprep.subr.mxu0 0.0
  %524 = vmatpush1.msra.mxu0 %v136
  %525 = vmatprep.subr.mxu0 0.0
  %526 = vmatpush1.msra.mxu0 %v137
  %527 = vmatprep.subr.mxu0 0.0
  %528 = vmatpush1.msra.mxu0 %v138
  %529 = vmatprep.subr.mxu0 0.0
  %530 = vmatpush1.msra.mxu0 %v139
  %531 = vmatprep.subr.mxu0 0.0
  %532 = vmatpush1.msra.mxu0 %v140
  %533 = vmatprep.subr.mxu0 0.0
  %534 = vmatpush1.msra.mxu0 %v141
  %535 = vmatprep.subr.mxu0 0.0
  %536 = vmatpush1.msra.mxu0 %v142
  %537 = vmatprep.subr.mxu0 0.0
  %538 = vmatpush1.msra.mxu0 %v143
  %539 = vmatprep.subr.mxu0 0.0
  %540 = vmatpush1.msra.mxu0 %v144
  %541 = vmatprep.subr.mxu0 0.0
  %542 = vmatpush1.msra.mxu0 %v145
  %543 = vmatprep.subr.mxu0 0.0
  %544 = vmatpush1.msra.mxu0 %v146
  %545 = vmatprep.subr.mxu0 0.0
  %546 = vmatpush1.msra.mxu0 %v147
  %547 = vmatprep.subr.mxu0 0.0
  %548 = vmatpush1.msra.mxu0 %v148
  %549 = vmatprep.subr.mxu0 0.0
  %550 = vmatpush1.msra.mxu0 %v149
  %551 = vmatprep.subr.mxu0 0.0
  %552 = vmatpush1.msra.mxu0 %v150
  %553 = vmatprep.subr.mxu0 0.0
  %554 = vmatpush1.msra.mxu0 %v151
  %555 = vmatprep.subr.mxu0 0.0
  %556 = vmatpush1.msra.mxu0 %v152
  %557 = vmatprep.subr.mxu0 0.0
  %558 = vmatpush1.msra.mxu0 %v153
  %559 = vmatprep.subr.mxu0 0.0
  %560 = vmatpush1.msra.mxu0 %v154
  %561 = vmatprep.subr.mxu0 0.0
  %562 = vmatpush1.msra.mxu0 %v155
  %563 = vmatprep.subr.mxu0 0.0
  %564 = vmatpush1.msra.mxu0 %v156
  %565 = vmatprep.subr.mxu0 0.0
  %566 = vmatpush1.msra.mxu0 %v157
  %567 = vmatprep.mubr.f32.mxu0 %v21
  %568 = vmatmul.mubr.f32.gmra.mrb[0].mxu0 %v20
  %v569 = vpop.f32.mrb[0].mxu0
  %v570 = vadd.f32 %v500, %v569
  %v571 = vpop.f32.mrb[0].mxu0
  %572 = vdwg.mxu0
  %573 = vmatprep.subr.mxu0 0.0
  %574 = vmatpush1.msra.mxu0 %v158
  %575 = vmatprep.subr.mxu0 0.0
  %576 = vmatpush1.msra.mxu0 %v159
  %577 = vmatprep.subr.mxu0 0.0
  %578 = vmatpush1.msra.mxu0 %v160
  %579 = vmatprep.subr.mxu0 0.0
  %580 = vmatpush1.msra.mxu0 %v161
  %581 = vmatprep.subr.mxu0 0.0
  %582 = vmatpush1.msra.mxu0 %v162
  %583 = vmatprep.subr.mxu0 0.0
  %584 = vmatpush1.msra.mxu0 %v163
  %585 = vmatprep.subr.mxu0 0.0
  %586 = vmatpush1.msra.mxu0 %v164
  %587 = vmatprep.subr.mxu0 0.0
  %588 = vmatpush1.msra.mxu0 %v165
  %589 = vmatprep.subr.mxu0 0.0
  %590 = vmatpush1.msra.mxu0 %v166
  %591 = vmatprep.subr.mxu0 0.0
  %592 = vmatpush1.msra.mxu0 %v167
  %593 = vmatprep.subr.mxu0 0.0
  %594 = vmatpush1.msra.mxu0 %v168
  %595 = vmatprep.subr.mxu0 0.0
  %596 = vmatpush1.msra.mxu0 %v169
  %597 = vmatprep.subr.mxu0 0.0
  %598 = vmatpush1.msra.mxu0 %v170
  %599 = vmatprep.subr.mxu0 0.0
  %600 = vmatpush1.msra.mxu0 %v171
  %601 = vmatprep.subr.mxu0 0.0
  %602 = vmatpush1.msra.mxu0 %v172
  %603 = vmatprep.subr.mxu0 0.0
  %604 = vmatpush1.msra.mxu0 %v173
  %605 = vmatprep.subr.mxu0 0.0
  %606 = vmatpush1.msra.mxu0 %v174
  %607 = vmatprep.subr.mxu0 0.0
  %608 = vmatpush1.msra.mxu0 %v175
  %609 = vmatprep.subr.mxu0 0.0
  %610 = vmatpush1.msra.mxu0 %v176
  %611 = vmatprep.subr.mxu0 0.0
  %612 = vmatpush1.msra.mxu0 %v177
  %613 = vmatprep.subr.mxu0 0.0
  %614 = vmatpush1.msra.mxu0 %v178
  %615 = vmatprep.subr.mxu0 0.0
  %616 = vmatpush1.msra.mxu0 %v179
  %617 = vmatprep.subr.mxu0 0.0
  %618 = vmatpush1.msra.mxu0 %v180
  %619 = vmatprep.subr.mxu0 0.0
  %620 = vmatpush1.msra.mxu0 %v181
  %621 = vmatprep.subr.mxu0 0.0
  %622 = vmatpush1.msra.mxu0 %v182
  %623 = vmatprep.subr.mxu0 0.0
  %624 = vmatpush1.msra.mxu0 %v183
  %625 = vmatprep.subr.mxu0 0.0
  %626 = vmatpush1.msra.mxu0 %v184
  %627 = vmatprep.subr.mxu0 0.0
  %628 = vmatpush1.msra.mxu0 %v185
  %629 = vmatprep.subr.mxu0 0.0
  %630 = vmatpush1.msra.mxu0 %v186
  %631 = vmatprep.subr.mxu0 0.0
  %632 = vmatpush1.msra.mxu0 %v187
  %633 = vmatprep.subr.mxu0 0.0
  %634 = vmatpush1.msra.mxu0 %v188
  %635 = vmatprep.subr.mxu0 0.0
  %636 = vmatpush1.msra.mxu0 %v189
  %637 = vmatprep.mubr.f32.mxu0 %v23
  %638 = vmatmul.mubr.f32.gmra.mrb[0].mxu0 %v22
  %v639 = vpop.f32.mrb[0].mxu0
  %v640 = vadd.f32 %v570, %v639
  %v641 = vpop.f32.mrb[0].mxu0
  %642 = vdwg.mxu0
  %643 = vmatprep.subr.mxu0 0.0
  %644 = vmatpush1.msra.mxu0 %v190
  %645 = vmatprep.subr.mxu0 0.0
  %646 = vmatpush1.msra.mxu0 %v191
  %647 = vmatprep.subr.mxu0 0.0
  %648 = vmatpush1.msra.mxu0 %v192
  %649 = vmatprep.subr.mxu0 0.0
  %650 = vmatpush1.msra.mxu0 %v193
  %651 = vmatprep.subr.mxu0 0.0
  %652 = vmatpush1.msra.mxu0 %v194
  %653 = vmatprep.subr.mxu0 0.0
  %654 = vmatpush1.msra.mxu0 %v195
  %655 = vmatprep.subr.mxu0 0.0
  %656 = vmatpush1.msra.mxu0 %v196
  %657 = vmatprep.subr.mxu0 0.0
  %658 = vmatpush1.msra.mxu0 %v197
  %659 = vmatprep.subr.mxu0 0.0
  %660 = vmatpush1.msra.mxu0 %v198
  %661 = vmatprep.subr.mxu0 0.0
  %662 = vmatpush1.msra.mxu0 %v199
  %663 = vmatprep.subr.mxu0 0.0
  %664 = vmatpush1.msra.mxu0 %v200
  %665 = vmatprep.subr.mxu0 0.0
  %666 = vmatpush1.msra.mxu0 %v201
  %667 = vmatprep.subr.mxu0 0.0
  %668 = vmatpush1.msra.mxu0 %v202
  %669 = vmatprep.subr.mxu0 0.0
  %670 = vmatpush1.msra.mxu0 %v203
  %671 = vmatprep.subr.mxu0 0.0
  %672 = vmatpush1.msra.mxu0 %v204
  %673 = vmatprep.subr.mxu0 0.0
  %674 = vmatpush1.msra.mxu0 %v205
  %675 = vmatprep.subr.mxu0 0.0
  %676 = vmatpush1.msra.mxu0 %v206
  %677 = vmatprep.subr.mxu0 0.0
  %678 = vmatpush1.msra.mxu0 %v207
  %679 = vmatprep.subr.mxu0 0.0
  %680 = vmatpush1.msra.mxu0 %v208
  %681 = vmatprep.subr.mxu0 0.0
  %682 = vmatpush1.msra.mxu0 %v209
  %683 = vmatprep.subr.mxu0 0.0
  %684 = vmatpush1.msra.mxu0 %v210
  %685 = vmatprep.subr.mxu0 0.0
  %686 = vmatpush1.msra.mxu0 %v211
  %687 = vmatprep.subr.mxu0 0.0
  %688 = vmatpush1.msra.mxu0 %v212
  %689 = vmatprep.subr.mxu0 0.0
  %690 = vmatpush1.msra.mxu0 %v213
  %691 = vmatprep.subr.mxu0 0.0
  %692 = vmatpush1.msra.mxu0 %v214
  %693 = vmatprep.subr.mxu0 0.0
  %694 = vmatpush1.msra.mxu0 %v215
  %695 = vmatprep.subr.mxu0 0.0
  %696 = vmatpush1.msra.mxu0 %v216
  %697 = vmatprep.subr.mxu0 0.0
  %698 = vmatpush1.msra.mxu0 %v217
  %699 = vmatprep.subr.mxu0 0.0
  %700 = vmatpush1.msra.mxu0 %v218
  %701 = vmatprep.subr.mxu0 0.0
  %702 = vmatpush1.msra.mxu0 %v219
  %703 = vmatprep.subr.mxu0 0.0
  %704 = vmatpush1.msra.mxu0 %v220
  %705 = vmatprep.subr.mxu0 0.0
  %706 = vmatpush1.msra.mxu0 %v221
  %707 = vmatprep.mubr.f32.mxu0 %v25
  %708 = vmatmul.mubr.f32.gmra.mrb[0].mxu0 %v24
  %v709 = vpop.f32.mrb[0].mxu0
  %v710 = vadd.f32 %v640, %v709
  %v711 = vpop.f32.mrb[0].mxu0
  %712 = vdwg.mxu0
  %713 = vmatprep.subr.mxu0 0.0
  %714 = vmatpush1.msra.mxu0 %v222
  %715 = vmatprep.subr.mxu0 0.0
  %716 = vmatpush1.msra.mxu0 %v223
  %717 = vmatprep.subr.mxu0 0.0
  %718 = vmatpush1.msra.mxu0 %v224
  %719 = vmatprep.subr.mxu0 0.0
  %720 = vmatpush1.msra.mxu0 %v225
  %721 = vmatprep.subr.mxu0 0.0
  %722 = vmatpush1.msra.mxu0 %v226
  %723 = vmatprep.subr.mxu0 0.0
  %724 = vmatpush1.msra.mxu0 %v227
  %725 = vmatprep.subr.mxu0 0.0
  %726 = vmatpush1.msra.mxu0 %v228
  %727 = vmatprep.subr.mxu0 0.0
  %728 = vmatpush1.msra.mxu0 %v229
  %729 = vmatprep.subr.mxu0 0.0
  %730 = vmatpush1.msra.mxu0 %v230
  %731 = vmatprep.subr.mxu0 0.0
  %732 = vmatpush1.msra.mxu0 %v231
  %733 = vmatprep.subr.mxu0 0.0
  %734 = vmatpush1.msra.mxu0 %v232
  %735 = vmatprep.subr.mxu0 0.0
  %736 = vmatpush1.msra.mxu0 %v233
  %737 = vmatprep.subr.mxu0 0.0
  %738 = vmatpush1.msra.mxu0 %v234
  %739 = vmatprep.subr.mxu0 0.0
  %740 = vmatpush1.msra.mxu0 %v235
  %741 = vmatprep.subr.mxu0 0.0
  %742 = vmatpush1.msra.mxu0 %v236
  %743 = vmatprep.subr.mxu0 0.0
  %744 = vmatpush1.msra.mxu0 %v237
  %745 = vmatprep.subr.mxu0 0.0
  %746 = vmatpush1.msra.mxu0 %v238
  %747 = vmatprep.subr.mxu0 0.0
  %748 = vmatpush1.msra.mxu0 %v239
  %749 = vmatprep.subr.mxu0 0.0
  %750 = vmatpush1.msra.mxu0 %v240
  %751 = vmatprep.subr.mxu0 0.0
  %752 = vmatpush1.msra.mxu0 %v241
  %753 = vmatprep.subr.mxu0 0.0
  %754 = vmatpush1.msra.mxu0 %v242
  %755 = vmatprep.subr.mxu0 0.0
  %756 = vmatpush1.msra.mxu0 %v243
  %757 = vmatprep.subr.mxu0 0.0
  %758 = vmatpush1.msra.mxu0 %v244
  %759 = vmatprep.subr.mxu0 0.0
  %760 = vmatpush1.msra.mxu0 %v245
  %761 = vmatprep.subr.mxu0 0.0
  %762 = vmatpush1.msra.mxu0 %v246
  %763 = vmatprep.subr.mxu0 0.0
  %764 = vmatpush1.msra.mxu0 %v247
  %765 = vmatprep.subr.mxu0 0.0
  %766 = vmatpush1.msra.mxu0 %v248
  %767 = vmatprep.subr.mxu0 0.0
  %768 = vmatpush1.msra.mxu0 %v249
  %769 = vmatprep.subr.mxu0 0.0
  %770 = vmatpush1.msra.mxu0 %v250
  %771 = vmatprep.subr.mxu0 0.0
  %772 = vmatpush1.msra.mxu0 %v251
  %773 = vmatprep.subr.mxu0 0.0
  %774 = vmatpush1.msra.mxu0 %v252
  %775 = vmatprep.subr.mxu0 0.0
  %776 = vmatpush1.msra.mxu0 %v253
  %777 = vmatprep.mubr.f32.mxu0 %v27
  %778 = vmatmul.mubr.f32.gmra.mrb[0].mxu0 %v26
  %v779 = vpop.f32.mrb[0].mxu0
  %v780 = vadd.f32 %v710, %v779
  %v781 = vpop.f32.mrb[0].mxu0
  %782 = vdwg.mxu0
  %783 = vmatprep.subr.mxu0 0.0
  %784 = vmatpush1.msra.mxu0 %v254
  %785 = vmatprep.subr.mxu0 0.0
  %786 = vmatpush1.msra.mxu0 %v255
  %787 = vmatprep.subr.mxu0 0.0
  %788 = vmatpush1.msra.mxu0 %v256
  %789 = vmatprep.subr.mxu0 0.0
  %790 = vmatpush1.msra.mxu0 %v257
  %791 = vmatprep.subr.mxu0 0.0
  %792 = vmatpush1.msra.mxu0 %v258
  %793 = vmatprep.subr.mxu0 0.0
  %794 = vmatpush1.msra.mxu0 %v259
  %795 = vmatprep.subr.mxu0 0.0
  %796 = vmatpush1.msra.mxu0 %v260
  %797 = vmatprep.subr.mxu0 0.0
  %798 = vmatpush1.msra.mxu0 %v261
  %799 = vmatprep.subr.mxu0 0.0
  %800 = vmatpush1.msra.mxu0 %v262
  %801 = vmatprep.subr.mxu0 0.0
  %802 = vmatpush1.msra.mxu0 %v263
  %803 = vmatprep.subr.mxu0 0.0
  %804 = vmatpush1.msra.mxu0 %v264
  %805 = vmatprep.subr.mxu0 0.0
  %806 = vmatpush1.msra.mxu0 %v265
  %807 = vmatprep.subr.mxu0 0.0
  %808 = vmatpush1.msra.mxu0 %v266
  %809 = vmatprep.subr.mxu0 0.0
  %810 = vmatpush1.msra.mxu0 %v267
  %811 = vmatprep.subr.mxu0 0.0
  %812 = vmatpush1.msra.mxu0 %v268
  %813 = vmatprep.subr.mxu0 0.0
  %814 = vmatpush1.msra.mxu0 %v269
  %815 = vmatprep.subr.mxu0 0.0
  %816 = vmatpush1.msra.mxu0 %v270
  %817 = vmatprep.subr.mxu0 0.0
  %818 = vmatpush1.msra.mxu0 %v271
  %819 = vmatprep.subr.mxu0 0.0
  %820 = vmatpush1.msra.mxu0 %v272
  %821 = vmatprep.subr.mxu0 0.0
  %822 = vmatpush1.msra.mxu0 %v273
  %823 = vmatprep.subr.mxu0 0.0
  %824 = vmatpush1.msra.mxu0 %v274
  %825 = vmatprep.subr.mxu0 0.0
  %826 = vmatpush1.msra.mxu0 %v275
  %827 = vmatprep.subr.mxu0 0.0
  %828 = vmatpush1.msra.mxu0 %v276
  %829 = vmatprep.subr.mxu0 0.0
  %830 = vmatpush1.msra.mxu0 %v277
  %831 = vmatprep.subr.mxu0 0.0
  %832 = vmatpush1.msra.mxu0 %v278
  %833 = vmatprep.subr.mxu0 0.0
  %834 = vmatpush1.msra.mxu0 %v279
  %835 = vmatprep.subr.mxu0 0.0
  %836 = vmatpush1.msra.mxu0 %v280
  %837 = vmatprep.subr.mxu0 0.0
  %838 = vmatpush1.msra.mxu0 %v281
  %839 = vmatprep.subr.mxu0 0.0
  %840 = vmatpush1.msra.mxu0 %v282
  %841 = vmatprep.subr.mxu0 0.0
  %842 = vmatpush1.msra.mxu0 %v283
  %843 = vmatprep.subr.mxu0 0.0
  %844 = vmatpush1.msra.mxu0 %v284
  %845 = vmatprep.subr.mxu0 0.0
  %846 = vmatpush1.msra.mxu0 %v285
  %847 = vmatprep.mubr.f32.mxu0 %v29
  %848 = vmatmul.mubr.f32.gmra.mrb[0].mxu0 %v28
  %v849 = vpop.f32.mrb[0].mxu0
  %v850 = vadd.f32 %v780, %v849
  %v851 = vpop.f32.mrb[0].mxu0
  %852 = vdwg.mxu0
  %vm853 = vcmask 23552
  %854 = vst.msk [vmem:[%s3] sm:$0xff] %vm853, %v850
  // Predicated region
  $region14: #{tpu_custom_call.1} parent=0 // pred_check
    _
  $region15: #{tpu_custom_call.1} parent=0 // pred_check_branch
    %856 = sbr.rel (0) target = $region17
  $region16: #{tpu_custom_call.1} parent=0 // pred_region
    _
  $region17: #{tpu_custom_call.1} parent=0 // pred_fallthru
    _
  // Predicated region
  $region18: #{tpu_custom_call.1} parent=0 // pred_check
    _
  $region19: #{tpu_custom_call.1} parent=0 // pred_check_branch
    %858 = sbr.rel (0) target = $region21
  $region20: #{tpu_custom_call.1} parent=0 // pred_region
    _
  $region21: #{tpu_custom_call.1} parent=0 // pred_fallthru
    _

</llo_original>
